<compile_context>
chip_gen: v6e
topology: v6e:2x2x1
jax: 0.10.0
libtpu: 0.0.40
codegen_flags: <defaults>
</compile_context>

<pallas_src>
import math

import jax
import jax.numpy as jnp
from jax import lax
from jax.experimental import pallas as pl
from jax.experimental.pallas import tpu as pltpu

STD_OFFSET = 1e-10

# Double-buffered BlockSpec working-set budget, and the scoped-VMEM limit we ask
# the compiler for.  16 MiB working set + 2x headroom is safe on every
# generation (scoped defaults: 16 MiB v5e, 32 MiB v6e/v7x; physical >= 64 MiB).
_VMEM_WORKING_SET_BYTES = 16 * 1024 * 1024
_VMEM_LIMIT_BYTES = 32 * 1024 * 1024


def _softplus(x):
    # Numerically stable softplus: max(x, 0) + log1p(exp(-|x|))
    return jnp.maximum(x, 0.0) + jnp.log1p(jnp.exp(-jnp.abs(x)))


def _choose_tile_batch(B, D, itemsize):
    """Pick a batch tile from the VMEM budget, the real dtype itemsize, and B."""
    per_row = 2 * 3 * D * itemsize            # means + stds + out blocks, double-buffered
    fixed = 2 * (4 * D + 4 * D)               # gvec block (f32) + f32 KL partial row, x2 buffers
    tb_max = max(8, (_VMEM_WORKING_SET_BYTES - fixed) // per_row)
    tb_max = (tb_max // 8) * 8                 # sublane-aligned

    if B < 16:
        return B                               # tiny batch: single full-extent tile

    # v7x has 2 TensorCores sharing HBM; guarantee >= 2 tiles so the "parallel"
    # batch axis shards work (harmless serial loop on v5e/v6e).
    cap = max(8, min(tb_max, ((B // 2) // 8) * 8))

    # Prefer a tile that divides B exactly -> masked last-tile path statically dead.
    if B % 8 == 0:
        tb = cap
        while tb >= 8:
            if B % tb == 0:
                return tb
            tb -= 8

    # Fallback: ragged batch, masked last tile.
    return min(cap, B)


def normal_distribution_forward(means, stds_raw, gaussian_vector, tile_batch=None):
    """means, stds_raw: (B, D) (f32 or bf16); gaussian_vector: (D,). Returns (output, kl)."""
    B, D = means.shape
    out_dtype = means.dtype
    gvec = gaussian_vector.reshape(1, D).astype(jnp.float32)   # tiny, keep f32

    itemsize = jnp.dtype(means.dtype).itemsize
    TB = tile_batch if tile_batch is not None else _choose_tile_batch(B, D, itemsize)
    TB = min(TB, B)
    num_tiles = pl.cdiv(B, TB)
    needs_mask = (num_tiles * TB) != B        # last tile partially out of bounds

    def kernel(means_ref, stds_raw_ref, gvec_ref, out_ref, kl_part_ref):
        means_blk = means_ref[...].astype(jnp.float32)          # (TB, D)
        stds = _softplus(stds_raw_ref[...].astype(jnp.float32))
        g = gvec_ref[...].astype(jnp.float32)                   # (1, D), broadcasts

        # Reparameterized sample
        x = g * stds + means_blk
        out_ref[...] = x.astype(out_ref.dtype)

        # Per-element KL contribution; the constant -0.5*g^2 term is hoisted to
        # the wrapper (no per-element broadcast/mul/sub for it).
        diff = 0.5 * x * x - jnp.log(stds + STD_OFFSET)

        if needs_mask:  # statically dead when TB divides B
            rows = (pl.program_id(0) * TB
                    + lax.broadcasted_iota(jnp.int32, diff.shape, 0))
            diff = jnp.where(rows < B, diff, 0.0)

        # Per-tile, per-lane partial sums (sublane reduce only; lane-dense store).
        # Kept as a (1,1,D) block so the sublane/lane dims equal the full array dims.
        kl_part_ref[...] = jnp.sum(diff, axis=0, keepdims=True).reshape(1, 1, D)

    out, partials = pl.pallas_call(
        kernel,
        out_shape=(
            jax.ShapeDtypeStruct((B, D), out_dtype),
            jax.ShapeDtypeStruct((num_tiles, 1, D), jnp.float32),
        ),
        grid=(num_tiles,),
        in_specs=[
            pl.BlockSpec((TB, D), lambda i: (i, 0)),
            pl.BlockSpec((TB, D), lambda i: (i, 0)),
            pl.BlockSpec((1, D), lambda i: (0, 0)),   # resident broadcast vector
        ],
        out_specs=(
            pl.BlockSpec((TB, D), lambda i: (i, 0)),
            pl.BlockSpec((1, 1, D), lambda i: (i, 0, 0)),
        ),
        compiler_params=pltpu.CompilerParams(
            dimension_semantics=("parallel",),
            vmem_limit_bytes=_VMEM_LIMIT_BYTES),
    )(means, stds_raw, gvec)

    # Finish the mean and add back the hoisted constant -0.5*mean(g^2) term.
    kl = jnp.sum(partials) / jnp.float32(B * D) - 0.5 * jnp.mean(jnp.square(gvec))
    return out, kl


def _reference(means, stds_raw, gaussian_vector):
    """Pure-JAX reference matching the PyTorch module exactly (f32 math)."""
    means32 = means.astype(jnp.float32)
    stds = jax.nn.softplus(stds_raw.astype(jnp.float32))
    g = gaussian_vector.astype(jnp.float32)[None, :]
    x = g * stds + means32
    half_log_2pi = 0.5 * math.log(2.0 * math.pi)
    lp_q = (-0.5 * ((x - means32) / (stds + STD_OFFSET)) ** 2
            - jnp.log(stds + STD_OFFSET) - half_log_2pi)
    lp_p = (-0.5 * (x / (1.0 + STD_OFFSET)) ** 2
            - jnp.log(jnp.float32(1.0 + STD_OFFSET)) - half_log_2pi)
    return x, jnp.mean(lp_q - lp_p)


if __name__ == "__main__":
    output_dim = 128

    key = jax.random.PRNGKey(0)
    k_means, k_stds, k_gauss = jax.random.split(key, 3)

    # TODO(synk): torch.normal draw inside forward() is replaced by a host-side
    # deterministic standard-normal draw passed in as an input.
    gaussian_vector = jax.random.normal(k_gauss, (output_dim,), dtype=jnp.float32)

    # --- Case 1: f32 I/O, B divisible by the auto-chosen tile -> 2 parallel
    #     tiles (TB=24), mask path statically dead.
    batch = 48
    means = jax.random.normal(k_means, (batch, output_dim), dtype=jnp.float32)
    stds_raw = jax.random.normal(k_stds, (batch, output_dim), dtype=jnp.float32)

    out, kl = normal_distribution_forward(means, stds_raw, gaussian_vector)
    jax.block_until_ready((out, kl))

    ref_out, ref_kl = _reference(means, stds_raw, gaussian_vector)
    assert jnp.allclose(out, ref_out, atol=1e-5, rtol=1e-5), "f32 output mismatch"
    assert jnp.allclose(kl, ref_kl, atol=1e-5, rtol=1e-4), "f32 kl mismatch"

    # --- Case 2: bf16 I/O (half the HBM traffic) with a ragged batch -> exercises
    #     the masked last-tile fallback (3 tiles of 24 rows for B=50).
    batch2 = 50
    means_bf = jax.random.normal(k_means, (batch2, output_dim),
                                 dtype=jnp.float32).astype(jnp.bfloat16)
    stds_bf = jax.random.normal(k_stds, (batch2, output_dim),
                                dtype=jnp.float32).astype(jnp.bfloat16)

    out_bf, kl_bf = normal_distribution_forward(means_bf, stds_bf, gaussian_vector)
    jax.block_until_ready((out_bf, kl_bf))

    ref_out_bf, ref_kl_bf = _reference(means_bf, stds_bf, gaussian_vector)
    assert out_bf.dtype == jnp.bfloat16, "bf16 output dtype not preserved"
    assert jnp.allclose(out_bf.astype(jnp.float32), ref_out_bf,
                        atol=2e-2, rtol=2e-2), "bf16 output mismatch"
    assert jnp.allclose(kl_bf, ref_kl_bf, atol=1e-4, rtol=1e-3), "bf16 kl mismatch"

    print("KERNEL_OK")
</pallas_src>

<mosaic_0001>
module attributes {stable_mosaic.version = 11 : i64} {
  func.func @kernel(%arg0: i32, %arg1: memref<24x128xf32, #tpu.memory_space<vmem>>, %arg2: memref<24x128xf32, #tpu.memory_space<vmem>>, %arg3: memref<1x128xf32, #tpu.memory_space<vmem>>, %arg4: memref<24x128xf32, #tpu.memory_space<vmem>>, %arg5: memref<1x1x128xf32, #tpu.memory_space<vmem>>) attributes {dimension_semantics = [#tpu.dimension_semantics<parallel>], iteration_bounds = array<i64: 2>, scalar_prefetch = 0 : i64, scratch_operands = 0 : i64, tpu.core_type = #tpu.core_type<tc>, window_params = [{transform_indices = @transform_0, window_bounds = array<i64: 24, 128>}, {transform_indices = @transform_1, window_bounds = array<i64: 24, 128>}, {pipeline_mode = #tpu.pipeline_mode<synchronous>, transform_indices = @transform_2, window_bounds = array<i64: 1, 128>}, {transform_indices = @transform_3, window_bounds = array<i64: 24, 128>}, {transform_indices = @transform_4, window_bounds = array<i64: 1, 1, 128>}]} {
    %c0 = arith.constant 0 : index
    %c0_0 = arith.constant 0 : index
    %0 = vector.load %arg1[%c0, %c0_0] : memref<24x128xf32, #tpu.memory_space<vmem>>, vector<24x128xf32>
    %c0_1 = arith.constant 0 : index
    %c0_2 = arith.constant 0 : index
    %1 = vector.load %arg2[%c0_1, %c0_2] : memref<24x128xf32, #tpu.memory_space<vmem>>, vector<24x128xf32>
    %cst = arith.constant 0.000000e+00 : f32
    %2 = vector.broadcast %cst : f32 to vector<24x128xf32>
    %3 = arith.maximumf %1, %2 : vector<24x128xf32>
    %4 = math.absf %1 : vector<24x128xf32>
    %cst_3 = arith.constant 0.000000e+00 : f32
    %5 = vector.broadcast %cst_3 : f32 to vector<24x128xf32>
    %6 = arith.subf %5, %4 : vector<24x128xf32>
    %7 = math.exp %6 : vector<24x128xf32>
    %8 = math.log1p %7 : vector<24x128xf32>
    %9 = arith.addf %3, %8 : vector<24x128xf32>
    %c0_4 = arith.constant 0 : index
    %c0_5 = arith.constant 0 : index
    %10 = vector.load %arg3[%c0_4, %c0_5] : memref<1x128xf32, #tpu.memory_space<vmem>>, vector<1x128xf32>
    %11 = vector.broadcast %10 : vector<1x128xf32> to vector<24x128xf32>
    %12 = arith.mulf %11, %9 : vector<24x128xf32>
    %13 = arith.addf %12, %0 : vector<24x128xf32>
    %c0_6 = arith.constant 0 : index
    %c0_7 = arith.constant 0 : index
    %14 = vector.load %arg4[%c0_6, %c0_7] : memref<24x128xf32, #tpu.memory_space<vmem>>, vector<24x128xf32>
    tpu.vector_store %arg4[%c0_6, %c0_7], %13 {strides = array<i32>} : memref<24x128xf32, #tpu.memory_space<vmem>>, vector<24x128xf32>,
    %cst_8 = arith.constant 5.000000e-01 : f32
    %15 = vector.broadcast %cst_8 : f32 to vector<24x128xf32>
    %16 = arith.mulf %15, %13 : vector<24x128xf32>
    %17 = arith.mulf %16, %13 : vector<24x128xf32>
    %cst_9 = arith.constant 1.000000e-10 : f32
    %18 = vector.broadcast %cst_9 : f32 to vector<24x128xf32>
    %19 = arith.addf %9, %18 : vector<24x128xf32>
    %20 = math.log %19 : vector<24x128xf32>
    %21 = arith.subf %17, %20 : vector<24x128xf32>
    %cst_10 = arith.constant dense<0.000000e+00> : vector<128xf32>
    %22 = vector.multi_reduction <add>, %21, %cst_10 [0] : vector<24x128xf32> to vector<128xf32>
    %23 = vector.shape_cast %22 : vector<128xf32> to vector<1x128xf32>
    %24 = vector.shape_cast %23 : vector<1x128xf32> to vector<1x1x128xf32>
    %c0_11 = arith.constant 0 : index
    %c0_12 = arith.constant 0 : index
    %c0_13 = arith.constant 0 : index
    %25 = vector.load %arg5[%c0_11, %c0_12, %c0_13] : memref<1x1x128xf32, #tpu.memory_space<vmem>>, vector<1x1x128xf32>
    tpu.vector_store %arg5[%c0_11, %c0_12, %c0_13], %24 {strides = array<i32>} : memref<1x1x128xf32, #tpu.memory_space<vmem>>, vector<1x1x128xf32>,
    return
  }
  func.func @transform_0(%arg0: i32) -> (i32, i32) {
    %c0_i32 = arith.constant 0 : i32
    %c0_i32_0 = arith.constant 0 : i32
    return %arg0, %c0_i32 : i32, i32
  }
  func.func @transform_1(%arg0: i32) -> (i32, i32) {
    %c0_i32 = arith.constant 0 : i32
    %c0_i32_0 = arith.constant 0 : i32
    return %arg0, %c0_i32 : i32, i32
  }
  func.func @transform_2(%arg0: i32) -> (i32, i32) {
    %c0_i32 = arith.constant 0 : i32
    %c0_i32_0 = arith.constant 0 : i32
    %c0_i32_1 = arith.constant 0 : i32
    return %c0_i32, %c0_i32_0 : i32, i32
  }
  func.func @transform_3(%arg0: i32) -> (i32, i32) {
    %c0_i32 = arith.constant 0 : i32
    %c0_i32_0 = arith.constant 0 : i32
    return %arg0, %c0_i32 : i32, i32
  }
  func.func @transform_4(%arg0: i32) -> (i32, i32, i32) {
    %c0_i32 = arith.constant 0 : i32
    %c0_i32_0 = arith.constant 0 : i32
    %c0_i32_1 = arith.constant 0 : i32
    return %arg0, %c0_i32, %c0_i32_0 : i32, i32, i32
  }
}

</mosaic_0001>

<llo_original>
// kernel: tpu_custom_call.1
$region0: #{tpu_custom_call.1}
  #allocation0 [shape = 'u32[]', space=smem, size = 0x4, offset = 0x4, fixed_abs, tag = 'smem constant byte address 0x4 - core index']
  #allocation1 [shape = 'u32[144,128]{1,0:T(1,128)}', space=vmem, size = 0x12000, scoped, tag = 'internal scratch']
  %s0 = inlined_call_operand.hbm [shape: f32[48,128], index: 0, kind: input, shape index: {}]
  %s1 = inlined_call_operand.hbm [shape: f32[48,128], index: 1, kind: input, shape index: {}]
  %s2 = inlined_call_operand.vmem [shape: f32[1,128], index: 2, kind: input, shape index: {}]
  %s3 = inlined_call_operand.hbm [shape: f32[48,128], index: 3, kind: output, shape index: {0}]
  %s4 = inlined_call_operand.hbm [shape: f32[2,1,128], index: 4, kind: output, shape index: {1}]
  %5 = xla_tuple %s3, %s4
  %s6 = sld [smem:[#allocation0]]
  $region61: #{tpu_custom_call.1} parent=0
    _
  %s8 = ssub.s32 1, %s6
  %s9 = scalar_select 0, %s8, %s6
  $region1: #{tpu_custom_call.1} parent=0
    #allocation2 [shape = 'u8[24576]{0}', space=vmem, size = 0x6000, scoped, tag = 'input window, operand 0']
    #allocation3 [shape = 's32[2]{0}', space=sflag, size = 0x8, scoped, tag = 'scoped memory for tpu_custom_call.1']
    #allocation4 [shape = 's32[2]{0}', space=sflag, size = 0x8, scoped, tag = 'scoped memory for tpu_custom_call.1']
    #allocation5 [shape = 'u8[24576]{0}', space=vmem, size = 0x6000, scoped, tag = 'input window, operand 1']
    #allocation6 [shape = 's32[2]{0}', space=sflag, size = 0x8, scoped, tag = 'scoped memory for tpu_custom_call.1']
    #allocation7 [shape = 'u8[24576]{0}', space=vmem, size = 0x6000, scoped, tag = 'output window, operand 0']
    #allocation8 [shape = 'u8[1024]{0}', space=vmem, size = 0x400, scoped, tag = 'output window, operand 1']
    #allocation9 [shape = 's32[2]{0}', space=sflag, size = 0x8, scoped, tag = 'scoped memory for tpu_custom_call.1']
    %10 = vsyncpa [#allocation3], 0
    %s11 = scalar_lea.sflag [#allocation3], 1
    %12 = vsyncpa %s11, 0
    %13 = vsyncpa [#allocation6], 0
    %s14 = scalar_lea.sflag [#allocation6], 1
    %15 = vsyncpa %s14, 0
    %16 = vsyncpa [#allocation4], 0
    %s17 = scalar_lea.sflag [#allocation4], 1
    %18 = vsyncpa %s17, 0
    %19 = vsyncpa [#allocation9], 0
    %s20 = scalar_lea.sflag [#allocation9], 1
    %21 = vsyncpa %s20, 0
    loop: start=0, step=1, limit=4
    $region2: #{tpu_custom_call.1} parent=1 // loop_pre_header
      _
    $region3: #{tpu_custom_call.1} parent=1 // loop_header
      %s23 = sphi 0, %s27
      %p24 = scmp.ge.s32.totalorder %s23, 4
      %s33 = sphi 0, %s35
      %s36 = sphi 0, %s33
      %s37 = sphi 0, %s36
      %s53 = sphi 0, %s37
      %s59 = sphi 0, %s61
      %s62 = sphi 0, %s59
      %s63 = sphi 0, %s62
      %s79 = sphi 0, %s63
      %s83 = sphi 0, %s83
      %s85 = sphi 0, %s83
      %s86 = sphi 0, %s85
      %s100 = sphi 0, %s86
      %s106 = sphi 0, %s108
      %s109 = sphi 0, %s106
      %s110 = sphi 0, %s109
      %s126 = sphi 0, %s110
      %s132 = sphi 0, %s134
      %s135 = sphi 0, %s132
      %s136 = sphi 0, %s135
      %s152 = sphi 0, %s136
    $region4: #{tpu_custom_call.1} parent=1 // loop_header_branch
      %26 = sbr.rel (%p24) target = $region8
    $region5: #{tpu_custom_call.1} parent=1 // loop_body
      %s28 = ssub.s32 %s23, 1
      %s29 = ssub.s32 %s23, 2
      %s30 = sadd.s32 %s23, 1
      %s31 = ssub.s32 %s23, %s30
      %p32 = scmp.eq.s32.totalorder %s31, 0
      %s34 = sadd.s32 %s33, 1
      %s35 = scalar_select %p32, %s33, %s34
      %p38 = pneg %p32
      %p39 = scmp.eq.s32.totalorder %s23, 1
      %p40 = por %p38, %p39
      %p41 = scmp.ne.s32.totalorder %s33, %s36
      %p42 = scmp.eq.s32.totalorder %s23, 0
      %p43 = por %p41, %p42
      %p44 = scmp.ne.s32.totalorder %s33, %s36
      %p45 = scmp.eq.s32.totalorder %s28, 1
      %p46 = por %p44, %p45
      %p47 = scmp.ne.s32.totalorder %s36, %s37
      %p48 = scmp.eq.s32.totalorder %s28, 0
      %p49 = por %p47, %p48
      %p50 = scmp.ne.s32.totalorder %s36, %s37
      %p51 = scmp.eq.s32.totalorder %s29, 1
      %p52 = por %p50, %p51
      %p54 = scmp.ne.s32.totalorder %s37, %s53
      %p55 = scmp.eq.s32.totalorder %s29, 0
      %p56 = por %p54, %p55
      %s57 = ssub.s32 %s23, %s30
      %p58 = scmp.eq.s32.totalorder %s57, 0
      %s60 = sadd.s32 %s59, 1
      %s61 = scalar_select %p58, %s59, %s60
      %p64 = pneg %p58
      %p65 = scmp.eq.s32.totalorder %s23, 1
      %p66 = por %p64, %p65
      %p67 = scmp.ne.s32.totalorder %s59, %s62
      %p68 = scmp.eq.s32.totalorder %s23, 0
      %p69 = por %p67, %p68
      %p70 = scmp.ne.s32.totalorder %s59, %s62
      %p71 = scmp.eq.s32.totalorder %s28, 1
      %p72 = por %p70, %p71
      %p73 = scmp.ne.s32.totalorder %s62, %s63
      %p74 = scmp.eq.s32.totalorder %s28, 0
      %p75 = por %p73, %p74
      %p76 = scmp.ne.s32.totalorder %s62, %s63
      %p77 = scmp.eq.s32.totalorder %s29, 1
      %p78 = por %p76, %p77
      %p80 = scmp.ne.s32.totalorder %s63, %s79
      %p81 = scmp.eq.s32.totalorder %s29, 0
      %p82 = por %p80, %p81
      %s84 = sadd.s32 %s83, 1
      %p87 = scmp.eq.s32.totalorder %s23, 1
      %p88 = scmp.ne.s32.totalorder %s83, %s85
      %p89 = scmp.eq.s32.totalorder %s23, 0
      %p90 = por %p88, %p89
      %p91 = scmp.ne.s32.totalorder %s83, %s85
      %p92 = scmp.eq.s32.totalorder %s28, 1
      %p93 = por %p91, %p92
      %p94 = scmp.ne.s32.totalorder %s85, %s86
      %p95 = scmp.eq.s32.totalorder %s28, 0
      %p96 = por %p94, %p95
      %p97 = scmp.ne.s32.totalorder %s85, %s86
      %p98 = scmp.eq.s32.totalorder %s29, 1
      %p99 = por %p97, %p98
      %p101 = scmp.ne.s32.totalorder %s86, %s100
      %p102 = scmp.eq.s32.totalorder %s29, 0
      %p103 = por %p101, %p102
      %s104 = ssub.s32 %s23, %s30
      %p105 = scmp.eq.s32.totalorder %s104, 0
      %s107 = sadd.s32 %s106, 1
      %s108 = scalar_select %p105, %s106, %s107
      %p111 = pneg %p105
      %p112 = scmp.eq.s32.totalorder %s23, 1
      %p113 = por %p111, %p112
      %p114 = scmp.ne.s32.totalorder %s106, %s109
      %p115 = scmp.eq.s32.totalorder %s23, 0
      %p116 = por %p114, %p115
      %p117 = scmp.ne.s32.totalorder %s106, %s109
      %p118 = scmp.eq.s32.totalorder %s28, 1
      %p119 = por %p117, %p118
      %p120 = scmp.ne.s32.totalorder %s109, %s110
      %p121 = scmp.eq.s32.totalorder %s28, 0
      %p122 = por %p120, %p121
      %p123 = scmp.ne.s32.totalorder %s109, %s110
      %p124 = scmp.eq.s32.totalorder %s29, 1
      %p125 = por %p123, %p124
      %p127 = scmp.ne.s32.totalorder %s110, %s126
      %p128 = scmp.eq.s32.totalorder %s29, 0
      %p129 = por %p127, %p128
      %s130 = ssub.s32 %s23, %s30
      %p131 = scmp.eq.s32.totalorder %s130, 0
      %s133 = sadd.s32 %s132, 1
      %s134 = scalar_select %p131, %s132, %s133
      %p137 = pneg %p131
      %p138 = scmp.eq.s32.totalorder %s23, 1
      %p139 = por %p137, %p138
      %p140 = scmp.ne.s32.totalorder %s132, %s135
      %p141 = scmp.eq.s32.totalorder %s23, 0
      %p142 = por %p140, %p141
      %p143 = scmp.ne.s32.totalorder %s132, %s135
      %p144 = scmp.eq.s32.totalorder %s28, 1
      %p145 = por %p143, %p144
      %p146 = scmp.ne.s32.totalorder %s135, %s136
      %p147 = scmp.eq.s32.totalorder %s28, 0
      %p148 = por %p146, %p147
      %p149 = scmp.ne.s32.totalorder %s135, %s136
      %p150 = scmp.eq.s32.totalorder %s29, 1
      %p151 = por %p149, %p150
      %p153 = scmp.ne.s32.totalorder %s136, %s152
      %p154 = scmp.eq.s32.totalorder %s29, 0
      %p155 = por %p153, %p154
      %p156 = scmp.le.s32.totalorder 1, %s23
      %p157 = scmp.lt.s32.totalorder %s23, 3
      %p158 = pnand %p156, %p157
      %p159 = pneg %p158
      // Predicated region
      $region9: #{tpu_custom_call.1} parent=5 // pred_check
        _
      $region10: #{tpu_custom_call.1} parent=5 // pred_check_branch
        %161 = sbr.rel (%p158) target = $region12
      $region11: #{tpu_custom_call.1} parent=5 // pred_region
        %s162 = ssub.s32 %s23, 1
        // Predicated region
        $region13: #{tpu_custom_call.1} parent=11 // pred_check
          %p163 = pneg %p96
        $region14: #{tpu_custom_call.1} parent=11 // pred_check_branch
          %165 = sbr.rel (%p163) target = $region16
        $region15: #{tpu_custom_call.1} parent=11 // pred_region
          _
        $region16: #{tpu_custom_call.1} parent=11 // pred_fallthru
          _
      $region12: #{tpu_custom_call.1} parent=5 // pred_fallthru
        _
      %p166 = scmp.lt.s32.totalorder %s23, 2
      // Predicated region
      $region17: #{tpu_custom_call.1} parent=5 // pred_check
        %p167 = pneg %p166
      $region18: #{tpu_custom_call.1} parent=5 // pred_check_branch
        %169 = sbr.rel (%p167) target = $region20
      $region19: #{tpu_custom_call.1} parent=5 // pred_region
        // Predicated region
        $region21: #{tpu_custom_call.1} parent=19 // pred_check
          %p170 = pneg %p43
        $region22: #{tpu_custom_call.1} parent=19 // pred_check_branch
          %172 = sbr.rel (%p170) target = $region24
        $region23: #{tpu_custom_call.1} parent=19 // pred_region
          %s173 = sand.u32 %s33, 1
          %s174 = scalar_lea.sflag [#allocation3], %s173
          %s175 = sand.u32 %s33, 1
          %s176 = smul.addr %s175, 24
          %s177 = scalar_lea.vmem [#allocation2], %s176
          %s178 = smul.u32 3, %s23
          %s180 = ssub.s32 384, 384
          %181 = vsyncadd %s174, %s180
          %s182 = smul.addr %s178, 128
          %s183 = scalar_lea.hbm %s0, %s182
          %s184 = sshll.u32 %s177, 4
          %s185 = int_to_ptr.vmem [resolvable:$true] %s184
          %190 = dma.hbm_to_vmem [thread:$0]  %s183, 384, %s185, %s174, 128, 128, 8
        $region24: #{tpu_custom_call.1} parent=19 // pred_fallthru
          _
        // Predicated region
        $region25: #{tpu_custom_call.1} parent=19 // pred_check
          %p191 = pneg %p69
        $region26: #{tpu_custom_call.1} parent=19 // pred_check_branch
          %193 = sbr.rel (%p191) target = $region28
        $region27: #{tpu_custom_call.1} parent=19 // pred_region
          %s194 = sand.u32 %s59, 1
          %s195 = scalar_lea.sflag [#allocation6], %s194
          %s196 = sand.u32 %s59, 1
          %s197 = smul.addr %s196, 24
          %s198 = scalar_lea.vmem [#allocation5], %s197
          %s199 = smul.u32 3, %s23
          %s201 = ssub.s32 384, 384
          %202 = vsyncadd %s195, %s201
          %s203 = smul.addr %s199, 128
          %s204 = scalar_lea.hbm %s1, %s203
          %s205 = sshll.u32 %s198, 4
          %s206 = int_to_ptr.vmem [resolvable:$true] %s205
          %211 = dma.hbm_to_vmem [thread:$0]  %s204, 384, %s206, %s195, 128, 128, 8
        $region28: #{tpu_custom_call.1} parent=19 // pred_fallthru
          _
      $region20: #{tpu_custom_call.1} parent=5 // pred_fallthru
        _
      %p212 = scmp.le.s32.totalorder 1, %s23
      %p213 = scmp.lt.s32.totalorder %s23, 3
      %p214 = pnand %p212, %p213
      %p215 = pneg %p214
      // Predicated region
      $region29: #{tpu_custom_call.1} parent=5 // pred_check
        _
      $region30: #{tpu_custom_call.1} parent=5 // pred_check_branch
        %217 = sbr.rel (%p214) target = $region32
      $region31: #{tpu_custom_call.1} parent=5 // pred_region
        %s218 = ssub.s32 %s23, 1
        %s219 = sand.u32 %s36, 1
        %s220 = scalar_lea.sflag [#allocation3], %s219
        %s221 = sand.u32 %s36, 1
        %s222 = smul.addr %s221, 24
        %s223 = scalar_lea.vmem [#allocation2], %s222
        // Predicated region
        $region33: #{tpu_custom_call.1} parent=31 // pred_check
          %p224 = pneg %p49
        $region34: #{tpu_custom_call.1} parent=31 // pred_check_branch
          %226 = sbr.rel (%p224) target = $region36
        $region35: #{tpu_custom_call.1} parent=31 // pred_region
          %227 = dma.done %s220, 384
        $region36: #{tpu_custom_call.1} parent=31 // pred_fallthru
          _
        %s228 = sand.u32 %s62, 1
        %s229 = scalar_lea.sflag [#allocation6], %s228
        %s230 = sand.u32 %s62, 1
        %s231 = smul.addr %s230, 24
        %s232 = scalar_lea.vmem [#allocation5], %s231
        // Predicated region
        $region37: #{tpu_custom_call.1} parent=31 // pred_check
          %p233 = pneg %p75
        $region38: #{tpu_custom_call.1} parent=31 // pred_check_branch
          %235 = sbr.rel (%p233) target = $region40
        $region39: #{tpu_custom_call.1} parent=31 // pred_region
          %236 = dma.done %s229, 384
        $region40: #{tpu_custom_call.1} parent=31 // pred_fallthru
          _
        %s237 = sand.u32 %s36, 1
        %s238 = scalar_lea.sflag [#allocation3], %s237
        %s239 = sand.u32 %s36, 1
        %s240 = smul.addr %s239, 24
        %s241 = scalar_lea.vmem [#allocation2], %s240
        %p242 = pneg %p49
        %p243 = pneg %p46
        %s244 = sand.u32 %s62, 1
        %s245 = scalar_lea.sflag [#allocation6], %s244
        %s246 = sand.u32 %s62, 1
        %s247 = smul.addr %s246, 24
        %s248 = scalar_lea.vmem [#allocation5], %s247
        %p249 = pneg %p75
        %p250 = pneg %p72
        %p251 = pneg %p96
        %p252 = pneg %p93
        %p253 = pneg %p122
        %p254 = pneg %p119
        %s255 = sand.u32 %s109, 1
        %s256 = scalar_lea.sflag [#allocation4], %s255
        %s257 = sand.u32 %s109, 1
        %s258 = smul.addr %s257, 24
        %s259 = scalar_lea.vmem [#allocation7], %s258
        %p260 = pneg %p148
        %p261 = pneg %p145
        %s262 = sand.u32 %s135, 1
        %s263 = scalar_lea.sflag [#allocation9], %s262
        %s264 = sand.u32 %s135, 1
        %s265 = scalar_lea.vmem [#allocation8], %s264
        %s266 = smul.u32 3, %s28
        %s267 = smul.u32 3, %s28
        %s268 = smul.u32 3, %s28
        %v269 = vld [vmem:[%s223] sm:$0xff]
        %v270 = vld [vmem:[%s223 + $0x8] sm:$0xff]
        %v271 = vld [vmem:[%s223 + $0x10] sm:$0xff]
        %v272 = vld [vmem:[%s232] sm:$0xff]
        %v273 = vld [vmem:[%s232 + $0x8] sm:$0xff]
        %v274 = vld [vmem:[%s232 + $0x10] sm:$0xff]
        %v275 = vmax.f32 %v272, 0.0
        %v276 = vmax.f32 %v273, 0.0
        %v277 = vmax.f32 %v274, 0.0
        %v278 = vand.u32 2147483647, %v272
        %v279 = vand.u32 2147483647, %v273
        %v280 = vand.u32 2147483647, %v274
        %v281 = vsub.f32 0.0, %v278
        %v282 = vsub.f32 0.0, %v279
        %v283 = vsub.f32 0.0, %v280
        %v284 = vmul.f32 %v281, 1.442695
        %v285 = vpow.pop %v284
        %v286 = vmul.f32 %v282, 1.442695
        %v287 = vpow.pop %v286
        %v288 = vmul.f32 %v283, 1.442695
        %v289 = vpow.pop %v288
        %v290 = vadd.f32 %v285, 1.0
        %v291 = vlog2.pop %v290
        %v292 = vmul.f32 %v291, 0.6931472
        %v293 = vmul.f32 -0.5, %v285
        %v294 = vadd.f32 %v293, 1.0
        %v295 = vmul.f32 %v294, %v285
        %v296 = vand.u32 2147483647, %v285
        %vm297 = vcmp.lt.f32.partialorder %v296, 0.0004427343
        %v298 = vsel %vm297, %v295, %v292
        %v299 = vadd.f32 %v287, 1.0
        %v300 = vlog2.pop %v299
        %v301 = vmul.f32 %v300, 0.6931472
        %v302 = vmul.f32 -0.5, %v287
        %v303 = vadd.f32 %v302, 1.0
        %v304 = vmul.f32 %v303, %v287
        %v305 = vand.u32 2147483647, %v287
        %vm306 = vcmp.lt.f32.partialorder %v305, 0.0004427343
        %v307 = vsel %vm306, %v304, %v301
        %v308 = vadd.f32 %v289, 1.0
        %v309 = vlog2.pop %v308
        %v310 = vmul.f32 %v309, 0.6931472
        %v311 = vmul.f32 -0.5, %v289
        %v312 = vadd.f32 %v311, 1.0
        %v313 = vmul.f32 %v312, %v289
        %v314 = vand.u32 2147483647, %v289
        %vm315 = vcmp.lt.f32.partialorder %v314, 0.0004427343
        %v316 = vsel %vm315, %v313, %v310
        %v317 = vadd.f32 %v275, %v298
        %v318 = vadd.f32 %v276, %v307
        %v319 = vadd.f32 %v277, %v316
        %v320 = vld [vmem:[%s2] sm:$0x1]
        %v322 = vlaneseq
        %v323 = vshrl.u32 %v322, 7
        %v324 = vsub.s32 0, %v323
        %v325 = vrot.slane %v320, %v324
        %v327 = vmul.f32 %v325, %v317
        %v328 = vmul.f32 %v325, %v318
        %v329 = vmul.f32 %v325, %v319
        %v330 = vadd.f32 %v327, %v269
        %v331 = vadd.f32 %v328, %v270
        %v332 = vadd.f32 %v329, %v271
        %333 = vst [vmem:[%s259] sm:$0xff] %v330
        %334 = vst [vmem:[%s259 + $0x8] sm:$0xff] %v331
        %335 = vst [vmem:[%s259 + $0x10] sm:$0xff] %v332
        %v336 = vmul.f32 %v330, 0.5
        %v337 = vmul.f32 %v331, 0.5
        %v338 = vmul.f32 %v332, 0.5
        %v339 = vmul.f32 %v336, %v330
        %v340 = vmul.f32 %v337, %v331
        %v341 = vmul.f32 %v338, %v332
        %v342 = vadd.f32 %v317, 1e-10
        %v343 = vadd.f32 %v318, 1e-10
        %v344 = vadd.f32 %v319, 1e-10
        %v345 = vlog2.pop %v342
        %v346 = vmul.f32 %v345, 0.6931472
        %v347 = vlog2.pop %v343
        %v348 = vmul.f32 %v347, 0.6931472
        %v349 = vlog2.pop %v344
        %v350 = vmul.f32 %v349, 0.6931472
        %v351 = vsub.f32 %v339, %v346
        %v352 = vsub.f32 %v340, %v348
        %v353 = vsub.f32 %v341, %v350
        %v354 = vadd.f32 %v351, %v352
        %v355 = vadd.f32 %v354, %v353
        %v356 = vrot.slane %v355, 4
        %v357 = vadd.f32 %v355, %v356
        %v358 = vrot.slane %v357, 2
        %v359 = vadd.f32 %v357, %v358
        %v360 = vrot.slane %v359, 1
        %v361 = vadd.f32 %v359, %v360
        %362 = vst [vmem:[%s265] sm:$0x1] %v361
        %s363 = sand.u32 %s109, 1
        %s364 = scalar_lea.sflag [#allocation4], %s363
        %s365 = sand.u32 %s109, 1
        %s366 = smul.addr %s365, 24
        %s367 = scalar_lea.vmem [#allocation7], %s366
        %s368 = sand.u32 %s135, 1
        %s369 = scalar_lea.sflag [#allocation9], %s368
        %s370 = sand.u32 %s135, 1
        %s371 = scalar_lea.vmem [#allocation8], %s370
        // Predicated region
        $region41: #{tpu_custom_call.1} parent=31 // pred_check
          %p372 = pneg %p119
        $region42: #{tpu_custom_call.1} parent=31 // pred_check_branch
          %374 = sbr.rel (%p372) target = $region44
        $region43: #{tpu_custom_call.1} parent=31 // pred_region
          %s375 = smul.u32 3, %s28
          %s377 = ssub.s32 384, 384
          %378 = vsyncadd %s364, %s377
          %s379 = smul.addr %s375, 128
          %s380 = scalar_lea.hbm %s3, %s379
          %s381 = sshll.u32 %s367, 4
          %s382 = int_to_ptr.vmem [resolvable:$true] %s381
          %387 = dma.vmem_to_hbm [thread:$0]  %s382, 384, %s380, %s364, 128, 128, 8
        $region44: #{tpu_custom_call.1} parent=31 // pred_fallthru
          _
        // Predicated region
        $region45: #{tpu_custom_call.1} parent=31 // pred_check
          %p388 = pneg %p145
        $region46: #{tpu_custom_call.1} parent=31 // pred_check_branch
          %390 = sbr.rel (%p388) target = $region48
        $region47: #{tpu_custom_call.1} parent=31 // pred_region
          %s392 = ssub.s32 16, 16
          %393 = vsyncadd %s369, %s392
          %s394 = smul.addr %s28, 16
          %s395 = scalar_lea.hbm %s4, %s394
          %s397 = sshll.u32 %s371, 4
          %s398 = int_to_ptr.vmem [resolvable:$true] %s397
          %400 = dma.vmem_to_hbm [thread:$0]  %s398, 16, %s395, %s369
        $region48: #{tpu_custom_call.1} parent=31 // pred_fallthru
          _
      $region32: #{tpu_custom_call.1} parent=5 // pred_fallthru
        _
      %p401 = scmp.le.s32.totalorder 2, %s23
      // Predicated region
      $region49: #{tpu_custom_call.1} parent=5 // pred_check
        %p402 = pneg %p401
      $region50: #{tpu_custom_call.1} parent=5 // pred_check_branch
        %404 = sbr.rel (%p402) target = $region52
      $region51: #{tpu_custom_call.1} parent=5 // pred_region
        %s405 = ssub.s32 %s23, 2
        // Predicated region
        $region53: #{tpu_custom_call.1} parent=51 // pred_check
          %p406 = pneg %p125
        $region54: #{tpu_custom_call.1} parent=51 // pred_check_branch
          %408 = sbr.rel (%p406) target = $region56
        $region55: #{tpu_custom_call.1} parent=51 // pred_region
          %s409 = sand.u32 %s110, 1
          %s410 = scalar_lea.sflag [#allocation4], %s409
          %s411 = sand.u32 %s110, 1
          %s412 = smul.addr %s411, 24
          %s413 = scalar_lea.vmem [#allocation7], %s412
          %414 = dma.done %s410, 384
        $region56: #{tpu_custom_call.1} parent=51 // pred_fallthru
          _
        // Predicated region
        $region57: #{tpu_custom_call.1} parent=51 // pred_check
          %p415 = pneg %p151
        $region58: #{tpu_custom_call.1} parent=51 // pred_check_branch
          %417 = sbr.rel (%p415) target = $region60
        $region59: #{tpu_custom_call.1} parent=51 // pred_region
          %s418 = sand.u32 %s136, 1
          %s419 = scalar_lea.sflag [#allocation9], %s418
          %s420 = sand.u32 %s136, 1
          %s421 = scalar_lea.vmem [#allocation8], %s420
          %422 = dma.done %s419, 16
        $region60: #{tpu_custom_call.1} parent=51 // pred_fallthru
          _
      $region52: #{tpu_custom_call.1} parent=5 // pred_fallthru
        _
    $region6: #{tpu_custom_call.1} parent=1 // loop_footer
      %s27 = sadd.s32 1, %s23
    $region7: #{tpu_custom_call.1} parent=1 // loop_footer_branch
      %22 = sbr.rel target = $region3
    $region8: #{tpu_custom_call.1} parent=1 // loop_exit
      _
    %423 = vsyncpa [#allocation3], 1
    %s424 = scalar_lea.sflag [#allocation3], 1
    %425 = vsyncpa %s424, 1
    %426 = vsyncpa [#allocation6], 1
    %s427 = scalar_lea.sflag [#allocation6], 1
    %428 = vsyncpa %s427, 1
    %429 = vsyncpa [#allocation4], 1
    %s430 = scalar_lea.sflag [#allocation4], 1
    %431 = vsyncpa %s430, 1
    %432 = vsyncpa [#allocation9], 1
    %s433 = scalar_lea.sflag [#allocation9], 1
    %434 = vsyncpa %s433, 1

</llo_original>
